<compile_context>
chip_gen: v5e
topology: v5e:2x2
jax: 0.10.0
libtpu: 0.0.40
codegen_flags: <defaults>
</compile_context>

<pallas_src>
import functools

import jax
import jax.numpy as jnp
from jax.experimental import pallas as pl
from jax.experimental.pallas import tpu as pltpu

# MountainCarContinuous-v0: n_states = 2, n_actions = 1
N_STATES = 2
N_ACTIONS = 1
INPUT_SIZE = N_STATES + N_ACTIONS      # 3
OUTPUT_SIZE = N_STATES                 # 2
HIDDEN_SIZES = (32, 32)                # hidden_sizes argument of the module


def _round_up(a, m):
    return ((a + m - 1) // m) * m


def _num_tensorcores():
    """Best-effort TensorCore count for the local chip (1 on v5e/v6e, 2 on v7x)."""
    try:
        dev = jax.devices()[0]
        n = getattr(dev, "num_cores", None)
        if isinstance(n, int) and n > 0:
            return min(n, 2)
        kind = (getattr(dev, "device_kind", "") or "").lower()
        if "v7" in kind or "7x" in kind:
            return 2
    except Exception:
        pass
    return 1


def _mlp_kernel(n_layers, x_ref, *refs):
    """Fused MLP forward: (Linear + ReLU) * len(hidden) then final Linear.

    refs layout: w0, b0, w1, b1, ..., w_{L-1}, b_{L-1}, out_ref
    where layer L-1 is the output layer (no ReLU).
    """
    out_ref = refs[-1]
    params = refs[:-1]
    h = x_ref[...]
    for i in range(n_layers):
        w = params[2 * i][...]
        b = params[2 * i + 1][...]
        # Matmuls hit the MXU; bias add + ReLU are VPU filler under the MXU pushes.
        h = jnp.dot(h, w, preferred_element_type=jnp.float32) + b  # b is (1, out): broadcasts
        if i < n_layers - 1:
            h = jnp.maximum(h, 0.0)                                # ReLU on hidden layers only
    out_ref[...] = h.astype(out_ref.dtype)


def dynamics_model_forward(x, weights, biases, *, batch_tile=2048):
    """Pallas implementation of dynamics_model_Net.forward.

    x:       (B, input_size) float32
    weights: list of (in_i, out_i) float32 arrays  (already transposed vs torch)
    biases:  list of (1, out_i) float32 arrays
    """
    B, in_dim = x.shape
    n_layers = len(weights)
    out_dim = weights[-1].shape[1]

    # --- tile selection --------------------------------------------------------
    # Minimum number of steps to keep each step under batch_tile rows; on dual-TC
    # chips (v7x) round the step count up to a multiple of the TC count so the
    # "parallel" batch axis shards across both cores.  Single step otherwise.
    n_tc = _num_tensorcores()
    steps = pl.cdiv(B, batch_tile)
    if n_tc > 1 and B >= 8 * n_tc:
        steps = _round_up(max(steps, n_tc), n_tc)
    tile = _round_up(pl.cdiv(B, steps), 8)
    grid = (pl.cdiv(B, tile),)   # last block may be partial: OOB writes are dropped

    # --- specs -------------------------------------------------------------------
    in_specs = [pl.BlockSpec((tile, in_dim), lambda i: (i, 0))]
    params = []
    for w, b in zip(weights, biases):
        # Constant index maps: Pallas DMAs each weight/bias once; every grid step
        # reuses the resident VMEM copy (~20 KB total, negligible on any gen).
        in_specs.append(pl.BlockSpec(w.shape, lambda i: (0, 0)))
        in_specs.append(pl.BlockSpec(b.shape, lambda i: (0, 0)))
        params.extend([w, b])
    out_specs = pl.BlockSpec((tile, out_dim), lambda i: (i, 0))

    # Advisory cost hint: tiny, memory-bound kernel.
    flops = 2 * int(B) * sum(int(w.shape[0]) * int(w.shape[1]) for w in weights)
    bytes_accessed = 4 * (int(B) * (int(in_dim) + int(out_dim))
                          + sum(int(w.size) + int(b.size) for w, b in zip(weights, biases)))

    kernel = functools.partial(_mlp_kernel, n_layers)

    return pl.pallas_call(
        kernel,
        out_shape=jax.ShapeDtypeStruct((B, out_dim), jnp.float32),
        grid=grid,
        in_specs=in_specs,
        out_specs=out_specs,
        compiler_params=pltpu.CompilerParams(
            dimension_semantics=("parallel",),
        ),
        cost_estimate=pl.CostEstimate(
            flops=flops, transcendentals=0, bytes_accessed=bytes_accessed),
    )(x, *params)


def init_params(key, input_size, hidden_sizes, output_size):
    """Deterministic nn.Linear-style init; weights stored as (in, out)."""
    sizes = [input_size] + list(hidden_sizes) + [output_size]
    weights, biases = [], []
    for fan_in, fan_out in zip(sizes[:-1], sizes[1:]):
        key, kw, kb = jax.random.split(key, 3)
        bound = 1.0 / jnp.sqrt(jnp.float32(fan_in))
        w = jax.random.uniform(kw, (fan_in, fan_out), jnp.float32, -bound, bound)
        b = jax.random.uniform(kb, (1, fan_out), jnp.float32, -bound, bound)
        weights.append(w)
        biases.append(b)
    return weights, biases


def reference_forward(x, weights, biases):
    h = x
    for i, (w, b) in enumerate(zip(weights, biases)):
        h = h @ w + b
        if i < len(weights) - 1:
            h = jnp.maximum(h, 0.0)
    return h


if __name__ == "__main__":
    key = jax.random.PRNGKey(0)
    key, kx = jax.random.split(key)

    B = 16  # small batch: 1 grid step on v5e/v6e, 2 parallel steps on v7x
    x = jax.random.normal(kx, (B, INPUT_SIZE), jnp.float32)

    weights, biases = init_params(key, INPUT_SIZE, HIDDEN_SIZES, OUTPUT_SIZE)

    out = dynamics_model_forward(x, weights, biases)
    out = jax.block_until_ready(out)

    ref = reference_forward(x, weights, biases)
    assert out.shape == (B, OUTPUT_SIZE), out.shape
    assert jnp.allclose(out, ref, atol=1e-5, rtol=1e-5), "mismatch vs reference"

    print("KERNEL_OK")
</pallas_src>

<mosaic_0001>
module attributes {stable_mosaic.version = 11 : i64} {
  func.func @_mlp_kernel(%arg0: i32, %arg1: memref<16x3xf32, #tpu.memory_space<vmem>>, %arg2: memref<3x32xf32, #tpu.memory_space<vmem>>, %arg3: memref<1x32xf32, #tpu.memory_space<vmem>>, %arg4: memref<32x32xf32, #tpu.memory_space<vmem>>, %arg5: memref<1x32xf32, #tpu.memory_space<vmem>>, %arg6: memref<32x2xf32, #tpu.memory_space<vmem>>, %arg7: memref<1x2xf32, #tpu.memory_space<vmem>>, %arg8: memref<16x2xf32, #tpu.memory_space<vmem>>) attributes {dimension_semantics = [#tpu.dimension_semantics<parallel>], iteration_bounds = array<i64: 1>, scalar_prefetch = 0 : i64, scratch_operands = 0 : i64, tpu.core_type = #tpu.core_type<tc>, window_params = [{transform_indices = @transform_0, window_bounds = array<i64: 16, 3>}, {pipeline_mode = #tpu.pipeline_mode<synchronous>, transform_indices = @transform_1, window_bounds = array<i64: 3, 32>}, {pipeline_mode = #tpu.pipeline_mode<synchronous>, transform_indices = @transform_2, window_bounds = array<i64: 1, 32>}, {pipeline_mode = #tpu.pipeline_mode<synchronous>, transform_indices = @transform_3, window_bounds = array<i64: 32, 32>}, {pipeline_mode = #tpu.pipeline_mode<synchronous>, transform_indices = @transform_4, window_bounds = array<i64: 1, 32>}, {pipeline_mode = #tpu.pipeline_mode<synchronous>, transform_indices = @transform_5, window_bounds = array<i64: 32, 2>}, {pipeline_mode = #tpu.pipeline_mode<synchronous>, transform_indices = @transform_6, window_bounds = array<i64: 1, 2>}, {transform_indices = @transform_7, window_bounds = array<i64: 16, 2>}]} {
    %c0 = arith.constant 0 : index
    %c0_0 = arith.constant 0 : index
    %0 = vector.load %arg1[%c0, %c0_0] : memref<16x3xf32, #tpu.memory_space<vmem>>, vector<16x3xf32>
    %c0_1 = arith.constant 0 : index
    %c0_2 = arith.constant 0 : index
    %1 = vector.load %arg2[%c0_1, %c0_2] : memref<3x32xf32, #tpu.memory_space<vmem>>, vector<3x32xf32>
    %c0_3 = arith.constant 0 : index
    %c0_4 = arith.constant 0 : index
    %2 = vector.load %arg3[%c0_3, %c0_4] : memref<1x32xf32, #tpu.memory_space<vmem>>, vector<1x32xf32>
    %cst = arith.constant dense<0.000000e+00> : vector<16x32xf32>
    %3 = tpu.matmul %0, %1, %cst {dimension_numbers = #tpu.dot_dimension_numbers<[1], [0], [0], [1], [0, 0, 1, 1], [], []>} : vector<16x3xf32>, vector<3x32xf32>, vector<16x32xf32> -> vector<16x32xf32>
    %4 = vector.broadcast %2 : vector<1x32xf32> to vector<16x32xf32>
    %5 = arith.addf %3, %4 : vector<16x32xf32>
    %cst_5 = arith.constant 0.000000e+00 : f32
    %6 = vector.broadcast %cst_5 : f32 to vector<16x32xf32>
    %7 = arith.maximumf %5, %6 : vector<16x32xf32>
    %c0_6 = arith.constant 0 : index
    %c0_7 = arith.constant 0 : index
    %8 = vector.load %arg4[%c0_6, %c0_7] : memref<32x32xf32, #tpu.memory_space<vmem>>, vector<32x32xf32>
    %c0_8 = arith.constant 0 : index
    %c0_9 = arith.constant 0 : index
    %9 = vector.load %arg5[%c0_8, %c0_9] : memref<1x32xf32, #tpu.memory_space<vmem>>, vector<1x32xf32>
    %cst_10 = arith.constant dense<0.000000e+00> : vector<16x32xf32>
    %10 = tpu.matmul %7, %8, %cst_10 {dimension_numbers = #tpu.dot_dimension_numbers<[1], [0], [0], [1], [0, 0, 1, 1], [], []>} : vector<16x32xf32>, vector<32x32xf32>, vector<16x32xf32> -> vector<16x32xf32>
    %11 = vector.broadcast %9 : vector<1x32xf32> to vector<16x32xf32>
    %12 = arith.addf %10, %11 : vector<16x32xf32>
    %cst_11 = arith.constant 0.000000e+00 : f32
    %13 = vector.broadcast %cst_11 : f32 to vector<16x32xf32>
    %14 = arith.maximumf %12, %13 : vector<16x32xf32>
    %c0_12 = arith.constant 0 : index
    %c0_13 = arith.constant 0 : index
    %15 = vector.load %arg6[%c0_12, %c0_13] : memref<32x2xf32, #tpu.memory_space<vmem>>, vector<32x2xf32>
    %c0_14 = arith.constant 0 : index
    %c0_15 = arith.constant 0 : index
    %16 = vector.load %arg7[%c0_14, %c0_15] : memref<1x2xf32, #tpu.memory_space<vmem>>, vector<1x2xf32>
    %cst_16 = arith.constant dense<0.000000e+00> : vector<16x2xf32>
    %17 = tpu.matmul %14, %15, %cst_16 {dimension_numbers = #tpu.dot_dimension_numbers<[1], [0], [0], [1], [0, 0, 1, 1], [], []>} : vector<16x32xf32>, vector<32x2xf32>, vector<16x2xf32> -> vector<16x2xf32>
    %18 = vector.broadcast %16 : vector<1x2xf32> to vector<16x2xf32>
    %19 = arith.addf %17, %18 : vector<16x2xf32>
    %c0_17 = arith.constant 0 : index
    %c0_18 = arith.constant 0 : index
    %20 = vector.load %arg8[%c0_17, %c0_18] : memref<16x2xf32, #tpu.memory_space<vmem>>, vector<16x2xf32>
    tpu.vector_store %arg8[%c0_17, %c0_18], %19 {strides = array<i32>} : memref<16x2xf32, #tpu.memory_space<vmem>>, vector<16x2xf32>,
    return
  }
  func.func @transform_0(%arg0: i32) -> (i32, i32) {
    %c0_i32 = arith.constant 0 : i32
    %c0_i32_0 = arith.constant 0 : i32
    return %arg0, %c0_i32 : i32, i32
  }
  func.func @transform_1(%arg0: i32) -> (i32, i32) {
    %c0_i32 = arith.constant 0 : i32
    %c0_i32_0 = arith.constant 0 : i32
    %c0_i32_1 = arith.constant 0 : i32
    return %c0_i32, %c0_i32_0 : i32, i32
  }
  func.func @transform_2(%arg0: i32) -> (i32, i32) {
    %c0_i32 = arith.constant 0 : i32
    %c0_i32_0 = arith.constant 0 : i32
    %c0_i32_1 = arith.constant 0 : i32
    return %c0_i32, %c0_i32_0 : i32, i32
  }
  func.func @transform_3(%arg0: i32) -> (i32, i32) {
    %c0_i32 = arith.constant 0 : i32
    %c0_i32_0 = arith.constant 0 : i32
    %c0_i32_1 = arith.constant 0 : i32
    return %c0_i32, %c0_i32_0 : i32, i32
  }
  func.func @transform_4(%arg0: i32) -> (i32, i32) {
    %c0_i32 = arith.constant 0 : i32
    %c0_i32_0 = arith.constant 0 : i32
    %c0_i32_1 = arith.constant 0 : i32
    return %c0_i32, %c0_i32_0 : i32, i32
  }
  func.func @transform_5(%arg0: i32) -> (i32, i32) {
    %c0_i32 = arith.constant 0 : i32
    %c0_i32_0 = arith.constant 0 : i32
    %c0_i32_1 = arith.constant 0 : i32
    return %c0_i32, %c0_i32_0 : i32, i32
  }
  func.func @transform_6(%arg0: i32) -> (i32, i32) {
    %c0_i32 = arith.constant 0 : i32
    %c0_i32_0 = arith.constant 0 : i32
    %c0_i32_1 = arith.constant 0 : i32
    return %c0_i32, %c0_i32_0 : i32, i32
  }
  func.func @transform_7(%arg0: i32) -> (i32, i32) {
    %c0_i32 = arith.constant 0 : i32
    %c0_i32_0 = arith.constant 0 : i32
    return %arg0, %c0_i32 : i32, i32
  }
}

</mosaic_0001>

<llo_original>
// kernel: tpu_custom_call.1
$region0: #{tpu_custom_call.1}
  #allocation0 [shape = 'u32[]', space=smem, size = 0x4, offset = 0x4, fixed_abs, tag = 'smem constant byte address 0x4 - core index']
  #allocation1 [shape = 'u32[72,128]{1,0:T(1,128)}', space=vmem, size = 0x9000, scoped, tag = 'internal scratch']
  %s0 = inlined_call_operand.vmem [shape: f32[16,3], index: 0, kind: input, shape index: {}]
  %s1 = inlined_call_operand.vmem [shape: f32[3,32], index: 1, kind: input, shape index: {}]
  %s2 = inlined_call_operand.vmem [shape: f32[1,32], index: 2, kind: input, shape index: {}]
  %s3 = inlined_call_operand.vmem [shape: f32[32,32], index: 3, kind: input, shape index: {}]
  %s4 = inlined_call_operand.vmem [shape: f32[1,32], index: 4, kind: input, shape index: {}]
  %s5 = inlined_call_operand.vmem [shape: f32[32,2], index: 5, kind: input, shape index: {}]
  %s6 = inlined_call_operand.vmem [shape: f32[1,2], index: 6, kind: input, shape index: {}]
  %s7 = inlined_call_operand.vmem [shape: f32[16,2], index: 7, kind: output, shape index: {}]
  %s8 = sld [smem:[#allocation0]]
  $region38: #{tpu_custom_call.1} parent=0
    _
  %s10 = ssub.s32 1, %s8
  %s11 = scalar_select 0, %s10, %s8
  // Predicated region
  $region2: #{tpu_custom_call.1} parent=0 // pred_check
    _
  $region3: #{tpu_custom_call.1} parent=0 // pred_check_branch
    %13 = sbr.rel (0) target = $region5
  $region4: #{tpu_custom_call.1} parent=0 // pred_region
    _
  $region5: #{tpu_custom_call.1} parent=0 // pred_fallthru
    _
  // Predicated region
  $region6: #{tpu_custom_call.1} parent=0 // pred_check
    _
  $region7: #{tpu_custom_call.1} parent=0 // pred_check_branch
    %15 = sbr.rel (0) target = $region9
  $region8: #{tpu_custom_call.1} parent=0 // pred_region
    _
  $region9: #{tpu_custom_call.1} parent=0 // pred_fallthru
    _
  // Predicated region
  $region10: #{tpu_custom_call.1} parent=0 // pred_check
    _
  $region11: #{tpu_custom_call.1} parent=0 // pred_check_branch
    %17 = sbr.rel (0) target = $region13
  $region12: #{tpu_custom_call.1} parent=0 // pred_region
    _
  $region13: #{tpu_custom_call.1} parent=0 // pred_fallthru
    _
  // Predicated region
  $region14: #{tpu_custom_call.1} parent=0 // pred_check
    _
  $region15: #{tpu_custom_call.1} parent=0 // pred_check_branch
    %19 = sbr.rel (0) target = $region17
  $region16: #{tpu_custom_call.1} parent=0 // pred_region
    _
  $region17: #{tpu_custom_call.1} parent=0 // pred_fallthru
    _
  // Predicated region
  $region18: #{tpu_custom_call.1} parent=0 // pred_check
    _
  $region19: #{tpu_custom_call.1} parent=0 // pred_check_branch
    %21 = sbr.rel (0) target = $region21
  $region20: #{tpu_custom_call.1} parent=0 // pred_region
    _
  $region21: #{tpu_custom_call.1} parent=0 // pred_fallthru
    _
  // Predicated region
  $region22: #{tpu_custom_call.1} parent=0 // pred_check
    _
  $region23: #{tpu_custom_call.1} parent=0 // pred_check_branch
    %23 = sbr.rel (0) target = $region25
  $region24: #{tpu_custom_call.1} parent=0 // pred_region
    _
  $region25: #{tpu_custom_call.1} parent=0 // pred_fallthru
    _
  // Predicated region
  $region26: #{tpu_custom_call.1} parent=0 // pred_check
    _
  $region27: #{tpu_custom_call.1} parent=0 // pred_check_branch
    %25 = sbr.rel (0) target = $region29
  $region28: #{tpu_custom_call.1} parent=0 // pred_region
    _
  $region29: #{tpu_custom_call.1} parent=0 // pred_fallthru
    _
  %v26 = vld [vmem:[%s0] sm:$0xff]
  %v27 = vld [vmem:[%s0 + $0x8] sm:$0xff]
  %v28 = vld [vmem:[%s1] sm:$0x7]
  %v29 = vld [vmem:[%s2] sm:$0x1]
  %v31 = vperm.slane %v29, 0
  %vm33 = vcmask 23552
  %v35 = vsel %vm33, %v26, 0
  %v38 = vsel %vm33, %v27, 0
  %vm40 = vcmask 1042432
  %v42 = vsel %vm40, %v28, 0
  %44 = vmatpush.msra.mxu0 0.0
  %45 = vmatpush.msra.mxu0 0.0
  %46 = vmatpush.msra.mxu0 0.0
  %47 = vmatpush.msra.mxu0 0.0
  %48 = vmatpush.msra.mxu0 0.0
  %49 = vmatpush.msra.mxu0 0.0
  %50 = vmatpush.msra.mxu0 0.0
  %51 = vmatpush.msra.mxu0 0.0
  %52 = vmatpush.msra.mxu0 0.0
  %53 = vmatpush.msra.mxu0 0.0
  %54 = vmatpush.msra.mxu0 0.0
  %55 = vmatpush.msra.mxu0 0.0
  %56 = vmatpush.msra.mxu0 0.0
  %57 = vmatpush.msra.mxu0 0.0
  %58 = vmatpush.msra.mxu0 0.0
  %59 = vmatpush.msra.mxu0 %v42
  %60 = vmatmul.f32.gmra.mxu0 %v35
  %v61 = vpop.f32.mrf.mxu0
  %v62 = vadd.f32 %v31, %v61
  %63 = vmatmul.f32.gmra.mxu0 %v38
  %v64 = vpop.f32.mrf.mxu0
  %v65 = vadd.f32 %v31, %v64
  %66 = vdwg.mxu0
  %v67 = vmax.f32 %v62, 0.0
  %v68 = vmax.f32 %v65, 0.0
  %v69 = vld [vmem:[%s3] sm:$0xff]
  %v70 = vld [vmem:[%s3 + $0x8] sm:$0xff]
  %v71 = vld [vmem:[%s3 + $0x10] sm:$0xff]
  %v72 = vld [vmem:[%s3 + $0x18] sm:$0xff]
  %v73 = vld [vmem:[%s4] sm:$0x1]
  %v75 = vperm.slane %v73, 0
  %vm77 = vcmask 261120
  %v79 = vsel %vm77, %v67, 0
  %v82 = vsel %vm77, %v68, 0
  %84 = vmatpush.msra.mxu0 0.0
  %85 = vmatpush.msra.mxu0 0.0
  %86 = vmatpush.msra.mxu0 0.0
  %87 = vmatpush.msra.mxu0 0.0
  %88 = vmatpush.msra.mxu0 0.0
  %89 = vmatpush.msra.mxu0 0.0
  %90 = vmatpush.msra.mxu0 0.0
  %91 = vmatpush.msra.mxu0 0.0
  %92 = vmatpush.msra.mxu0 0.0
  %93 = vmatpush.msra.mxu0 0.0
  %94 = vmatpush.msra.mxu0 0.0
  %95 = vmatpush.msra.mxu0 0.0
  %96 = vmatpush.msra.mxu0 %v72
  %97 = vmatpush.msra.mxu0 %v71
  %98 = vmatpush.msra.mxu0 %v70
  %99 = vmatpush.msra.mxu0 %v69
  %100 = vmatmul.f32.gmra.mxu0 %v79
  %v101 = vpop.f32.mrf.mxu0
  %v102 = vadd.f32 %v75, %v101
  %103 = vmatmul.f32.gmra.mxu0 %v82
  %v104 = vpop.f32.mrf.mxu0
  %v105 = vadd.f32 %v75, %v104
  %106 = vdwg.mxu0
  %v107 = vmax.f32 %v102, 0.0
  %v108 = vmax.f32 %v105, 0.0
  %v109 = vld [vmem:[%s5] sm:$0xff]
  %v110 = vld [vmem:[%s5 + $0x8] sm:$0xff]
  %v111 = vld [vmem:[%s5 + $0x10] sm:$0xff]
  %v112 = vld [vmem:[%s5 + $0x18] sm:$0xff]
  %v113 = vld [vmem:[%s6] sm:$0x1]
  %v115 = vperm.slane %v113, 0
  %v118 = vsel %vm77, %v107, 0
  %v121 = vsel %vm77, %v108, 0
  %123 = vmatpush.msra.mxu0 0.0
  %124 = vmatpush.msra.mxu0 0.0
  %125 = vmatpush.msra.mxu0 0.0
  %126 = vmatpush.msra.mxu0 0.0
  %127 = vmatpush.msra.mxu0 0.0
  %128 = vmatpush.msra.mxu0 0.0
  %129 = vmatpush.msra.mxu0 0.0
  %130 = vmatpush.msra.mxu0 0.0
  %131 = vmatpush.msra.mxu0 0.0
  %132 = vmatpush.msra.mxu0 0.0
  %133 = vmatpush.msra.mxu0 0.0
  %134 = vmatpush.msra.mxu0 0.0
  %135 = vmatpush.msra.mxu0 %v112
  %136 = vmatpush.msra.mxu0 %v111
  %137 = vmatpush.msra.mxu0 %v110
  %138 = vmatpush.msra.mxu0 %v109
  %139 = vmatmul.f32.gmra.mxu0 %v118
  %v140 = vpop.f32.mrf.mxu0
  %v141 = vadd.f32 %v115, %v140
  %142 = vmatmul.f32.gmra.mxu0 %v121
  %v143 = vpop.f32.mrf.mxu0
  %v144 = vadd.f32 %v115, %v143
  %145 = vdwg.mxu0
  %vm146 = vcmask 15360
  %147 = vst.msk [vmem:[%s7] sm:$0xff] %vm146, %v141
  %148 = vst.msk [vmem:[%s7 + $0x8] sm:$0xff] %vm146, %v144
  // Predicated region
  $region30: #{tpu_custom_call.1} parent=0 // pred_check
    _
  $region31: #{tpu_custom_call.1} parent=0 // pred_check_branch
    %150 = sbr.rel (0) target = $region33
  $region32: #{tpu_custom_call.1} parent=0 // pred_region
    _
  $region33: #{tpu_custom_call.1} parent=0 // pred_fallthru
    _
  // Predicated region
  $region34: #{tpu_custom_call.1} parent=0 // pred_check
    _
  $region35: #{tpu_custom_call.1} parent=0 // pred_check_branch
    %152 = sbr.rel (0) target = $region37
  $region36: #{tpu_custom_call.1} parent=0 // pred_region
    _
  $region37: #{tpu_custom_call.1} parent=0 // pred_fallthru
    _

</llo_original>
